<compile_context>
chip_gen: v6e
topology: v6e:2x2x1
jax: 0.10.0
libtpu: 0.0.40
codegen_flags: <defaults>
</compile_context>

<pallas_src>
import functools

import jax
import jax.numpy as jnp
from jax import lax
from jax.experimental import pallas as pl
from jax.experimental.pallas import tpu as pltpu

_LANE = 128
_UNROLL_MAX_SKIP = 6  # static unroll up to this many skip layers, fori_loop beyond


def _round_up(x, m):
    return (x + m - 1) // m * m


def _vmem_capacity_bytes():
    """Per-core VMEM capacity; conservative (v7x) fallback if query fails."""
    try:
        return int(pltpu.get_tpu_info().vmem_capacity_bytes)
    except Exception:
        return 64 * 1024 * 1024


def _make_kernel_1layer():
    def kernel(x_ref, w0t_ref, b_ref, out_ref):
        z = jnp.dot(x_ref[...], w0t_ref[...],
                    preferred_element_type=jnp.float32) + b_ref[0]
        out_ref[...] = jnp.maximum(z, 0.0).astype(out_ref.dtype)
    return kernel


def _make_kernel(n_skip: int, hid_p: int):
    unroll = n_skip <= _UNROLL_MAX_SKIP

    def kernel(x_ref, w0t_ref, wxt_ref, wyt_ref, b_ref, out_ref, xz_ref):
        x = x_ref[...]                       # (tb, n_in), MXU dtype
        mxu_dtype = x.dtype

        # Layer 0: y = relu(x @ W0^T + b0)   (f32 accumulation)
        y = jnp.maximum(
            jnp.dot(x, w0t_ref[...], preferred_element_type=jnp.float32) + b_ref[0],
            0.0)                             # (tb, hid_p) f32

        # Hoisted x-path: one wide lane-dense matmul for ALL skip layers,
        # parked in VMEM scratch so live ranges stay bounded and the per-layer
        # loop only keeps the serial y-matmul on the critical path.
        xz = jnp.dot(x, wxt_ref[...], preferred_element_type=jnp.float32)
        for i in range(n_skip):              # static, 128-aligned slices
            xz_ref[i] = xz[:, i * hid_p:(i + 1) * hid_p]

        if unroll:
            for i in range(n_skip):
                z = (jnp.dot(y.astype(mxu_dtype), wyt_ref[i],
                             preferred_element_type=jnp.float32)
                     + xz_ref[i] + b_ref[i + 1])
                y = jnp.maximum(z, 0.0)
        else:
            def body(i, y):
                z = (jnp.dot(y.astype(mxu_dtype), wyt_ref[i],
                             preferred_element_type=jnp.float32)
                     + xz_ref[i] + b_ref[i + 1])
                return jnp.maximum(z, 0.0)
            y = lax.fori_loop(0, n_skip, body, y)

        out_ref[...] = y.astype(out_ref.dtype)

    return kernel


@functools.partial(jax.jit, static_argnames=("mxu_dtype",))
def skip_network(x, weights, biases, *, mxu_dtype=None):
    """Pallas forward pass of SkipNetwork.

    Args:
      x:       (B, n_in)
      weights: tuple; weights[0]: (n_hid, n_in); weights[i>0]: (n_hid, n_hid + n_in)
      biases:  tuple of (n_hid,)
      mxu_dtype: dtype for MXU operands.  Default: bf16 when x is f32 (f32
        accumulation kept; results match f32 to ~1e-2), else x.dtype.
    Returns:
      (B, n_hid) activations, same dtype as x.
    """
    B, n_in = x.shape
    n_hid = weights[0].shape[0]
    n_layers = len(weights)
    n_skip = n_layers - 1
    out_dtype = x.dtype

    if mxu_dtype is None:
        mxu_dtype = jnp.bfloat16 if x.dtype == jnp.float32 else x.dtype
    mxu_bytes = jnp.dtype(mxu_dtype).itemsize
    out_bytes = jnp.dtype(out_dtype).itemsize

    # Lane-dense hidden dim (biggest measured lever when n_hid < 128).
    hid_p = _round_up(n_hid, _LANE)
    # Sublane-friendly batch padding.
    B_pad = _round_up(B, 8)

    # ---- one-time weight preprocessing: transpose + concat-split + pad ----
    def pad_cols(a, cols):
        return jnp.pad(a, ((0, 0), (0, cols - a.shape[1])))

    w0t = pad_cols(weights[0].T, hid_p).astype(mxu_dtype)            # (n_in, hid_p)
    b_stack = jnp.stack(
        [jnp.pad(b, (0, hid_p - n_hid)).reshape(1, hid_p) for b in biases]
    ).astype(jnp.float32)                                            # (L, 1, hid_p)

    if n_skip:
        # W_i = (n_hid, n_hid + n_in), cat order [y, x]:
        #   y-path = W_i[:, :n_hid], x-path = W_i[:, n_hid:]
        wyt = jnp.stack(
            [jnp.pad(w[:, :n_hid].T, ((0, hid_p - n_hid), (0, hid_p - n_hid)))
             for w in weights[1:]]
        ).astype(mxu_dtype)                                          # (n_skip, hid_p, hid_p)
        wxt_wide = jnp.concatenate(
            [pad_cols(w[:, n_hid:].T, hid_p) for w in weights[1:]], axis=1
        ).astype(mxu_dtype)                                          # (n_in, n_skip*hid_p)

    x_in = x.astype(mxu_dtype)
    if B_pad != B:
        x_in = jnp.pad(x_in, ((0, B_pad - B), (0, 0)))

    # ---- batch tile / VMEM budget (generation aware) ----
    vmem_cap = _vmem_capacity_bytes()          # 128 MiB v5e/v6e, 64 MiB v7x
    budget = int(0.75 * vmem_cap)              # 96 MiB / 48 MiB

    def est(tb):
        byt = 2 * tb * n_in * mxu_bytes        # x blocks (double-buffered)
        byt += 2 * tb * hid_p * out_bytes      # out blocks
        byt += 2 * n_in * hid_p * mxu_bytes    # w0t
        byt += 2 * n_layers * hid_p * 4        # bias
        if n_skip:
            byt += 2 * n_in * n_skip * hid_p * mxu_bytes   # wxt_wide
            byt += 2 * n_skip * hid_p * hid_p * mxu_bytes  # wyt
            byt += n_skip * tb * hid_p * 4                 # xz scratch
        return byt

    tb = 8
    for cand in (1024, 512, 256, 128, 64, 32, 16, 8):
        if B_pad % cand == 0 and est(cand) <= budget:
            tb = cand
            break
    # Keep >= 2 grid steps when possible so both v7x TensorCores get work.
    if B_pad // tb < 2 and tb % 16 == 0 and B_pad % (tb // 2) == 0:
        tb //= 2

    vmem_limit = int(min(int(0.9 * vmem_cap), max(budget, est(tb) + (4 << 20))))

    # ---- pallas_call ----
    grid = (B_pad // tb,)
    x_spec = pl.BlockSpec((tb, n_in), lambda i: (i, 0))
    out_spec = pl.BlockSpec((tb, hid_p), lambda i: (i, 0))
    out_shape = jax.ShapeDtypeStruct((B_pad, hid_p), out_dtype)
    compiler_params = pltpu.CompilerParams(
        dimension_semantics=("parallel",),
        vmem_limit_bytes=vmem_limit,
    )

    if n_skip == 0:
        kernel = _make_kernel_1layer()
        in_specs = [
            x_spec,
            pl.BlockSpec((n_in, hid_p), lambda i: (0, 0)),
            pl.BlockSpec((n_layers, 1, hid_p), lambda i: (0, 0, 0)),
        ]
        args = (x_in, w0t, b_stack)
        scratch_shapes = []
    else:
        kernel = _make_kernel(n_skip, hid_p)
        in_specs = [
            x_spec,
            pl.BlockSpec((n_in, hid_p), lambda i: (0, 0)),
            pl.BlockSpec((n_in, n_skip * hid_p), lambda i: (0, 0)),
            pl.BlockSpec((n_skip, hid_p, hid_p), lambda i: (0, 0, 0)),
            pl.BlockSpec((n_layers, 1, hid_p), lambda i: (0, 0, 0)),
        ]
        args = (x_in, w0t, wxt_wide, wyt, b_stack)
        scratch_shapes = [pltpu.VMEM((n_skip, tb, hid_p), jnp.float32)]

    y_pad = pl.pallas_call(
        kernel,
        out_shape=out_shape,
        grid_spec=pltpu.PrefetchScalarGridSpec(
            num_scalar_prefetch=0,
            grid=grid,
            in_specs=in_specs,
            out_specs=out_spec,
            scratch_shapes=scratch_shapes,
        ),
        compiler_params=compiler_params,
    )(*args)

    return y_pad[:B, :n_hid]


if __name__ == "__main__":
    # Small shapes consistent with the module: batch=8, n_in=32, 3 layers, n_hid=32.
    B, n_in, n_layers, n_hid = 8, 32, 3, 32

    key = jax.random.PRNGKey(0)
    kx, key = jax.random.split(key)
    x = jax.random.normal(kx, (B, n_in), jnp.float32)

    def make_params(key, n_in, n_layers, n_hid):
        # nn.Linear-like deterministic init (uniform with bound 1/sqrt(fan_in)).
        weights, biases = [], []
        fan_ins = [n_in] + [n_in + n_hid] * (n_layers - 1)
        for fi in fan_ins:
            kw, kb, key = jax.random.split(key, 3)
            bound = float(fi) ** -0.5
            weights.append(
                jax.random.uniform(kw, (n_hid, fi), jnp.float32, -bound, bound))
            biases.append(
                jax.random.uniform(kb, (n_hid,), jnp.float32, -bound, bound))
        return tuple(weights), tuple(biases), key

    def reference(x, weights, biases):
        # Pure-JAX reference with the exact PyTorch semantics (concat + relu chain).
        y = jnp.maximum(x @ weights[0].T + biases[0], 0.0)
        for i in range(1, len(weights)):
            y = jnp.maximum(
                jnp.concatenate([y, x], axis=1) @ weights[i].T + biases[i], 0.0)
        return y

    weights, biases, key = make_params(key, n_in, n_layers, n_hid)
    y_ref = reference(x, weights, biases)

    # Default perf path: bf16 MXU operands, f32 accumulation (documented tolerance).
    out = skip_network(x, weights, biases)
    jax.block_until_ready(out)
    assert out.shape == (B, n_hid)
    assert out.dtype == x.dtype
    assert jnp.allclose(out, y_ref, atol=2e-2, rtol=2e-2), "bf16-MXU path mismatch"

    # Exact-math path validates the concat-split / padding decomposition tightly.
    out_f32 = skip_network(x, weights, biases, mxu_dtype=jnp.float32)
    jax.block_until_ready(out_f32)
    assert jnp.allclose(out_f32, y_ref, atol=1e-4, rtol=1e-4), "f32 path mismatch"

    # Deep network exercises the lax.fori_loop layer chain + batch padding.
    w_deep, b_deep, key = make_params(key, n_in, 8, n_hid)
    kx2, key = jax.random.split(key)
    x2 = jax.random.normal(kx2, (10, n_in), jnp.float32)
    out_deep = skip_network(x2, w_deep, b_deep, mxu_dtype=jnp.float32)
    jax.block_until_ready(out_deep)
    assert out_deep.shape == (10, n_hid)
    assert jnp.allclose(out_deep, reference(x2, w_deep, b_deep),
                        atol=1e-4, rtol=1e-4), "fori-loop path mismatch"

    print("KERNEL_OK")
</pallas_src>

<mosaic_0001>
module attributes {stable_mosaic.version = 11 : i64} {
  func.func @kernel(%arg0: i32, %arg1: memref<8x32xbf16, #tpu.memory_space<vmem>>, %arg2: memref<32x128xbf16, #tpu.memory_space<vmem>>, %arg3: memref<32x256xbf16, #tpu.memory_space<vmem>>, %arg4: memref<2x128x128xbf16, #tpu.memory_space<vmem>>, %arg5: memref<3x1x128xf32, #tpu.memory_space<vmem>>, %arg6: memref<8x128xf32, #tpu.memory_space<vmem>>, %arg7: memref<2x8x128xf32, #tpu.memory_space<vmem>>) attributes {dimension_semantics = [#tpu.dimension_semantics<parallel>], iteration_bounds = array<i64: 1>, scalar_prefetch = 0 : i64, scratch_operands = 1 : i64, tpu.core_type = #tpu.core_type<tc>, window_params = [{transform_indices = @transform_0, window_bounds = array<i64: 8, 32>}, {pipeline_mode = #tpu.pipeline_mode<synchronous>, transform_indices = @transform_1, window_bounds = array<i64: 32, 128>}, {pipeline_mode = #tpu.pipeline_mode<synchronous>, transform_indices = @transform_2, window_bounds = array<i64: 32, 256>}, {pipeline_mode = #tpu.pipeline_mode<synchronous>, transform_indices = @transform_3, window_bounds = array<i64: 2, 128, 128>}, {pipeline_mode = #tpu.pipeline_mode<synchronous>, transform_indices = @transform_4, window_bounds = array<i64: 3, 1, 128>}, {transform_indices = @transform_5, window_bounds = array<i64: 8, 128>}]} {
    %c0 = arith.constant 0 : index
    %c0_0 = arith.constant 0 : index
    %0 = vector.load %arg1[%c0, %c0_0] : memref<8x32xbf16, #tpu.memory_space<vmem>>, vector<8x32xbf16>
    %c0_1 = arith.constant 0 : index
    %c0_2 = arith.constant 0 : index
    %1 = vector.load %arg2[%c0_1, %c0_2] : memref<32x128xbf16, #tpu.memory_space<vmem>>, vector<32x128xbf16>
    %cst = arith.constant dense<0.000000e+00> : vector<8x128xf32>
    %2 = tpu.matmul %0, %1, %cst {dimension_numbers = #tpu.dot_dimension_numbers<[1], [0], [0], [1], [0, 0, 1, 1], [], []>} : vector<8x32xbf16>, vector<32x128xbf16>, vector<8x128xf32> -> vector<8x128xf32>
    %c0_3 = arith.constant 0 : index
    %c0_4 = arith.constant 0 : index
    %c0_5 = arith.constant 0 : index
    %3 = vector.load %arg5[%c0_3, %c0_4, %c0_5] : memref<3x1x128xf32, #tpu.memory_space<vmem>>, vector<1x1x128xf32>
    %4 = vector.shape_cast %3 : vector<1x1x128xf32> to vector<1x128xf32>
    %5 = vector.broadcast %4 : vector<1x128xf32> to vector<8x128xf32>
    %6 = arith.addf %2, %5 : vector<8x128xf32>
    %cst_6 = arith.constant 0.000000e+00 : f32
    %7 = vector.broadcast %cst_6 : f32 to vector<8x128xf32>
    %8 = arith.maximumf %6, %7 : vector<8x128xf32>
    %c0_7 = arith.constant 0 : index
    %c0_8 = arith.constant 0 : index
    %9 = vector.load %arg3[%c0_7, %c0_8] : memref<32x256xbf16, #tpu.memory_space<vmem>>, vector<32x256xbf16>
    %cst_9 = arith.constant dense<0.000000e+00> : vector<8x256xf32>
    %10 = tpu.matmul %0, %9, %cst_9 {dimension_numbers = #tpu.dot_dimension_numbers<[1], [0], [0], [1], [0, 0, 1, 1], [], []>} : vector<8x32xbf16>, vector<32x256xbf16>, vector<8x256xf32> -> vector<8x256xf32>
    %11 = vector.extract_strided_slice %10 {offsets = [0, 0], sizes = [8, 128], strides = [1, 1]} : vector<8x256xf32> to vector<8x128xf32>
    %c0_10 = arith.constant 0 : index
    %c0_11 = arith.constant 0 : index
    %c0_12 = arith.constant 0 : index
    %12 = vector.load %arg7[%c0_10, %c0_11, %c0_12] : memref<2x8x128xf32, #tpu.memory_space<vmem>>, vector<1x8x128xf32>
    %13 = vector.shape_cast %12 : vector<1x8x128xf32> to vector<8x128xf32>
    %14 = vector.shape_cast %11 : vector<8x128xf32> to vector<1x8x128xf32>
    tpu.vector_store %arg7[%c0_10, %c0_11, %c0_12], %14 {strides = array<i32>} : memref<2x8x128xf32, #tpu.memory_space<vmem>>, vector<1x8x128xf32>,
    %15 = vector.extract_strided_slice %10 {offsets = [0, 128], sizes = [8, 128], strides = [1, 1]} : vector<8x256xf32> to vector<8x128xf32>
    %c1 = arith.constant 1 : index
    %c0_13 = arith.constant 0 : index
    %c0_14 = arith.constant 0 : index
    %16 = vector.load %arg7[%c1, %c0_13, %c0_14] : memref<2x8x128xf32, #tpu.memory_space<vmem>>, vector<1x8x128xf32>
    %17 = vector.shape_cast %16 : vector<1x8x128xf32> to vector<8x128xf32>
    %18 = vector.shape_cast %15 : vector<8x128xf32> to vector<1x8x128xf32>
    tpu.vector_store %arg7[%c1, %c0_13, %c0_14], %18 {strides = array<i32>} : memref<2x8x128xf32, #tpu.memory_space<vmem>>, vector<1x8x128xf32>,
    %19 = arith.truncf %8 : vector<8x128xf32> to vector<8x128xbf16>
    %c0_15 = arith.constant 0 : index
    %c0_16 = arith.constant 0 : index
    %c0_17 = arith.constant 0 : index
    %20 = vector.load %arg4[%c0_15, %c0_16, %c0_17] : memref<2x128x128xbf16, #tpu.memory_space<vmem>>, vector<1x128x128xbf16>
    %21 = vector.shape_cast %20 : vector<1x128x128xbf16> to vector<128x128xbf16>
    %cst_18 = arith.constant dense<0.000000e+00> : vector<8x128xf32>
    %22 = tpu.matmul %19, %21, %cst_18 {dimension_numbers = #tpu.dot_dimension_numbers<[1], [0], [0], [1], [0, 0, 1, 1], [], []>} : vector<8x128xbf16>, vector<128x128xbf16>, vector<8x128xf32> -> vector<8x128xf32>
    %c0_19 = arith.constant 0 : index
    %c0_20 = arith.constant 0 : index
    %c0_21 = arith.constant 0 : index
    %23 = vector.load %arg7[%c0_19, %c0_20, %c0_21] : memref<2x8x128xf32, #tpu.memory_space<vmem>>, vector<1x8x128xf32>
    %24 = vector.shape_cast %23 : vector<1x8x128xf32> to vector<8x128xf32>
    %25 = arith.addf %22, %24 : vector<8x128xf32>
    %c1_22 = arith.constant 1 : index
    %c0_23 = arith.constant 0 : index
    %c0_24 = arith.constant 0 : index
    %26 = vector.load %arg5[%c1_22, %c0_23, %c0_24] : memref<3x1x128xf32, #tpu.memory_space<vmem>>, vector<1x1x128xf32>
    %27 = vector.shape_cast %26 : vector<1x1x128xf32> to vector<1x128xf32>
    %28 = vector.broadcast %27 : vector<1x128xf32> to vector<8x128xf32>
    %29 = arith.addf %25, %28 : vector<8x128xf32>
    %cst_25 = arith.constant 0.000000e+00 : f32
    %30 = vector.broadcast %cst_25 : f32 to vector<8x128xf32>
    %31 = arith.maximumf %29, %30 : vector<8x128xf32>
    %32 = arith.truncf %31 : vector<8x128xf32> to vector<8x128xbf16>
    %c1_26 = arith.constant 1 : index
    %c0_27 = arith.constant 0 : index
    %c0_28 = arith.constant 0 : index
    %33 = vector.load %arg4[%c1_26, %c0_27, %c0_28] : memref<2x128x128xbf16, #tpu.memory_space<vmem>>, vector<1x128x128xbf16>
    %34 = vector.shape_cast %33 : vector<1x128x128xbf16> to vector<128x128xbf16>
    %cst_29 = arith.constant dense<0.000000e+00> : vector<8x128xf32>
    %35 = tpu.matmul %32, %34, %cst_29 {dimension_numbers = #tpu.dot_dimension_numbers<[1], [0], [0], [1], [0, 0, 1, 1], [], []>} : vector<8x128xbf16>, vector<128x128xbf16>, vector<8x128xf32> -> vector<8x128xf32>
    %c1_30 = arith.constant 1 : index
    %c0_31 = arith.constant 0 : index
    %c0_32 = arith.constant 0 : index
    %36 = vector.load %arg7[%c1_30, %c0_31, %c0_32] : memref<2x8x128xf32, #tpu.memory_space<vmem>>, vector<1x8x128xf32>
    %37 = vector.shape_cast %36 : vector<1x8x128xf32> to vector<8x128xf32>
    %38 = arith.addf %35, %37 : vector<8x128xf32>
    %c2 = arith.constant 2 : index
    %c0_33 = arith.constant 0 : index
    %c0_34 = arith.constant 0 : index
    %39 = vector.load %arg5[%c2, %c0_33, %c0_34] : memref<3x1x128xf32, #tpu.memory_space<vmem>>, vector<1x1x128xf32>
    %40 = vector.shape_cast %39 : vector<1x1x128xf32> to vector<1x128xf32>
    %41 = vector.broadcast %40 : vector<1x128xf32> to vector<8x128xf32>
    %42 = arith.addf %38, %41 : vector<8x128xf32>
    %cst_35 = arith.constant 0.000000e+00 : f32
    %43 = vector.broadcast %cst_35 : f32 to vector<8x128xf32>
    %44 = arith.maximumf %42, %43 : vector<8x128xf32>
    %c0_36 = arith.constant 0 : index
    %c0_37 = arith.constant 0 : index
    %45 = vector.load %arg6[%c0_36, %c0_37] : memref<8x128xf32, #tpu.memory_space<vmem>>, vector<8x128xf32>
    tpu.vector_store %arg6[%c0_36, %c0_37], %44 {strides = array<i32>} : memref<8x128xf32, #tpu.memory_space<vmem>>, vector<8x128xf32>,
    return
  }
  func.func @transform_0(%arg0: i32) -> (i32, i32) {
    %c0_i32 = arith.constant 0 : i32
    %c0_i32_0 = arith.constant 0 : i32
    return %arg0, %c0_i32 : i32, i32
  }
  func.func @transform_1(%arg0: i32) -> (i32, i32) {
    %c0_i32 = arith.constant 0 : i32
    %c0_i32_0 = arith.constant 0 : i32
    %c0_i32_1 = arith.constant 0 : i32
    return %c0_i32, %c0_i32_0 : i32, i32
  }
  func.func @transform_2(%arg0: i32) -> (i32, i32) {
    %c0_i32 = arith.constant 0 : i32
    %c0_i32_0 = arith.constant 0 : i32
    %c0_i32_1 = arith.constant 0 : i32
    return %c0_i32, %c0_i32_0 : i32, i32
  }
  func.func @transform_3(%arg0: i32) -> (i32, i32, i32) {
    %c0_i32 = arith.constant 0 : i32
    %c0_i32_0 = arith.constant 0 : i32
    %c0_i32_1 = arith.constant 0 : i32
    %c0_i32_2 = arith.constant 0 : i32
    return %c0_i32, %c0_i32_0, %c0_i32_1 : i32, i32, i32
  }
  func.func @transform_4(%arg0: i32) -> (i32, i32, i32) {
    %c0_i32 = arith.constant 0 : i32
    %c0_i32_0 = arith.constant 0 : i32
    %c0_i32_1 = arith.constant 0 : i32
    %c0_i32_2 = arith.constant 0 : i32
    return %c0_i32, %c0_i32_0, %c0_i32_1 : i32, i32, i32
  }
  func.func @transform_5(%arg0: i32) -> (i32, i32) {
    %c0_i32 = arith.constant 0 : i32
    %c0_i32_0 = arith.constant 0 : i32
    return %arg0, %c0_i32 : i32, i32
  }
}

</mosaic_0001>

<llo_original>
// kernel: skip_network.1
$region0: #{skip_network.1}
  #allocation0 [shape = 'u32[]', space=smem, size = 0x4, offset = 0x4, fixed_abs, tag = 'smem constant byte address 0x4 - core index']
  #allocation1 [shape = 'u32[144,128]{1,0:T(1,128)}', space=vmem, size = 0x12000, scoped, tag = 'internal scratch']
  #allocation2 [shape = 'f32[2,8,128]{2,1,0:T(8,128)}', space=vmem, size = 0x2000, scoped, tag = 'scratch operand']
  %s0 = inlined_call_operand.vmem [shape: bf16[8,32], index: 0, kind: input, shape index: {}]
  %s1 = inlined_call_operand.vmem [shape: bf16[32,128], index: 1, kind: input, shape index: {}]
  %s2 = inlined_call_operand.vmem [shape: bf16[32,256], index: 2, kind: input, shape index: {}]
  %s3 = inlined_call_operand.vmem [shape: bf16[2,128,128], index: 3, kind: input, shape index: {}]
  %s4 = inlined_call_operand.vmem [shape: f32[3,1,128], index: 4, kind: input, shape index: {}]
  %s5 = inlined_call_operand.hbm [shape: f32[8,128], index: 5, kind: output, shape index: {}]
  %s6 = sld [smem:[#allocation0]]
  $region30: #{skip_network.1} parent=0
    _
  %s8 = ssub.s32 1, %s6
  %s9 = scalar_select 0, %s8, %s6
  $region1: #{skip_network.1} parent=0
    #allocation3 [shape = 'u8[4096]{0}', space=vmem, size = 0x1000, scoped, tag = 'output window, operand 0, single buffered']
    #allocation4 [shape = 's32[1]{0}', space=sflag, size = 0x4, scoped, tag = 'scoped memory for skip_network.1']
    %10 = vsyncpa [#allocation4], 0
    // Predicated region
    $region2: #{skip_network.1} parent=1 // pred_check
      _
    $region3: #{skip_network.1} parent=1 // pred_check_branch
      %12 = sbr.rel (0) target = $region5
    $region4: #{skip_network.1} parent=1 // pred_region
      _
    $region5: #{skip_network.1} parent=1 // pred_fallthru
      _
    // Predicated region
    $region6: #{skip_network.1} parent=1 // pred_check
      _
    $region7: #{skip_network.1} parent=1 // pred_check_branch
      %14 = sbr.rel (0) target = $region9
    $region8: #{skip_network.1} parent=1 // pred_region
      _
    $region9: #{skip_network.1} parent=1 // pred_fallthru
      _
    // Predicated region
    $region10: #{skip_network.1} parent=1 // pred_check
      _
    $region11: #{skip_network.1} parent=1 // pred_check_branch
      %16 = sbr.rel (0) target = $region13
    $region12: #{skip_network.1} parent=1 // pred_region
      _
    $region13: #{skip_network.1} parent=1 // pred_fallthru
      _
    // Predicated region
    $region14: #{skip_network.1} parent=1 // pred_check
      _
    $region15: #{skip_network.1} parent=1 // pred_check_branch
      %18 = sbr.rel (0) target = $region17
    $region16: #{skip_network.1} parent=1 // pred_region
      _
    $region17: #{skip_network.1} parent=1 // pred_fallthru
      _
    // Predicated region
    $region18: #{skip_network.1} parent=1 // pred_check
      _
    $region19: #{skip_network.1} parent=1 // pred_check_branch
      %20 = sbr.rel (0) target = $region21
    $region20: #{skip_network.1} parent=1 // pred_region
      _
    $region21: #{skip_network.1} parent=1 // pred_fallthru
      _
    %v22 = vld [vmem:[%s0] sm:$0xf]
    %v23 = vld [vmem:[%s1] sm:$0xf]
    %v24 = vld [vmem:[%s1 + $0x4] sm:$0xf]
    %v25 = vld [vmem:[%s1 + $0x8] sm:$0xf]
    %v26 = vld [vmem:[%s1 + $0xc] sm:$0xf]
    %v27 = vld [vmem:[%s4] sm:$0x1]
    %v29 = vlaneseq
    %v30 = vshrl.u32 %v29, 7
    %v31 = vsub.s32 0, %v30
    %v32 = vrot.slane %v27, %v31
    %v38 = vunpack.c.l.b16 %v23
    %v39 = vunpack.c.l.b16 %v24
    %v40 = vunpack.c.l.b16 %v25
    %v41 = vunpack.c.l.b16 %v26
    %v42 = vpack.c.b16 %v39, %v38
    %v43 = vpack.c.b16 %v41, %v40
    %vm46 = vcmask 261120
    %v48 = vsel %vm46, %v22, 0
    %50 = vmatprep.subr.bf16.mxu0 0
    %51 = vmatpush1.bf16.msra.mxu0 0
    %52 = vmatprep.subr.bf16.mxu0 0
    %53 = vmatpush1.bf16.msra.mxu0 0
    %54 = vmatprep.subr.bf16.mxu0 0
    %55 = vmatpush1.bf16.msra.mxu0 0
    %56 = vmatprep.subr.bf16.mxu0 0
    %57 = vmatpush1.bf16.msra.mxu0 0
    %58 = vmatprep.subr.bf16.mxu0 0
    %59 = vmatpush1.bf16.msra.mxu0 0
    %60 = vmatprep.subr.bf16.mxu0 0
    %61 = vmatpush1.bf16.msra.mxu0 0
    %62 = vmatprep.subr.bf16.mxu0 0
    %63 = vmatpush1.bf16.msra.mxu0 %v43
    %64 = vmatprep.subr.bf16.mxu0 0
    %65 = vmatpush1.bf16.msra.mxu0 %v42
    %66 = vmatprep.subr.bf16.mxu0 0
    %67 = vmatpush2.bf16.msra.mxu0 0
    %68 = vmatprep.subr.bf16.mxu0 0
    %69 = vmatpush2.bf16.msra.mxu0 0
    %70 = vmatprep.subr.bf16.mxu0 0
    %71 = vmatpush2.bf16.msra.mxu0 0
    %72 = vmatprep.subr.bf16.mxu0 0
    %73 = vmatpush2.bf16.msra.mxu0 0
    %74 = vmatprep.subr.bf16.mxu0 0
    %75 = vmatpush2.bf16.msra.mxu0 0
    %76 = vmatprep.subr.bf16.mxu0 0
    %77 = vmatpush2.bf16.msra.mxu0 0
    %78 = vmatprep.subr.bf16.mxu0 0
    %79 = vmatpush2.bf16.msra.mxu0 0
    %80 = vmatprep.subr.bf16.mxu0 0
    %81 = vmatpush2.bf16.msra.mxu0 0
    %82 = vmatprep.mubr.bf16.mxu0 0
    %83 = vmatmul.mubr.bf16.gmra.mxu0 %v48
    %v84 = vpop.f32.mrf.mxu0
    %v85 = vadd.f32 %v32, %v84
    %v86 = vpop.f32.mrf.mxu0
    %v87 = vpop.f32.mrf.mxu0
    %v88 = vpop.f32.mrf.mxu0
    %89 = vdwg.mxu0
    %v90 = vmax.f32 %v85, 0.0
    %v91 = vld [vmem:[%s2] sm:$0xff]
    %v92 = vld [vmem:[%s2 + $0x8] sm:$0xff]
    %v93 = vld [vmem:[%s2 + $0x10] sm:$0xff]
    %v94 = vld [vmem:[%s2 + $0x18] sm:$0xff]
    %v99 = vunpack.c.l.b16 %v91
    %v100 = vunpack.c.h.b16 %v91
    %v101 = vunpack.c.l.b16 %v92
    %v102 = vunpack.c.h.b16 %v92
    %v103 = vunpack.c.l.b16 %v93
    %v104 = vunpack.c.h.b16 %v93
    %v105 = vunpack.c.l.b16 %v94
    %v106 = vunpack.c.h.b16 %v94
    %v107 = vpack.c.b16 %v101, %v99
    %v108 = vpack.c.b16 %v102, %v100
    %v109 = vpack.c.b16 %v105, %v103
    %v110 = vpack.c.b16 %v106, %v104
    %115 = vmatprep.subr.bf16.mxu0 0
    %116 = vmatpush1.bf16.msra.mxu0 0
    %117 = vmatprep.subr.bf16.mxu0 0
    %118 = vmatpush1.bf16.msra.mxu0 0
    %119 = vmatprep.subr.bf16.mxu0 0
    %120 = vmatpush1.bf16.msra.mxu0 0
    %121 = vmatprep.subr.bf16.mxu0 0
    %122 = vmatpush1.bf16.msra.mxu0 0
    %123 = vmatprep.subr.bf16.mxu0 0
    %124 = vmatpush1.bf16.msra.mxu0 0
    %125 = vmatprep.subr.bf16.mxu0 0
    %126 = vmatpush1.bf16.msra.mxu0 0
    %127 = vmatprep.subr.bf16.mxu0 %v110
    %128 = vmatpush1.bf16.msra.mxu0 %v109
    %129 = vmatprep.subr.bf16.mxu0 %v108
    %130 = vmatpush1.bf16.msra.mxu0 %v107
    %131 = vmatprep.subr.bf16.mxu0 0
    %132 = vmatpush2.bf16.msra.mxu0 0
    %133 = vmatprep.subr.bf16.mxu0 0
    %134 = vmatpush2.bf16.msra.mxu0 0
    %135 = vmatprep.subr.bf16.mxu0 0
    %136 = vmatpush2.bf16.msra.mxu0 0
    %137 = vmatprep.subr.bf16.mxu0 0
    %138 = vmatpush2.bf16.msra.mxu0 0
    %139 = vmatprep.subr.bf16.mxu0 0
    %140 = vmatpush2.bf16.msra.mxu0 0
    %141 = vmatprep.subr.bf16.mxu0 0
    %142 = vmatpush2.bf16.msra.mxu0 0
    %143 = vmatprep.subr.bf16.mxu0 0
    %144 = vmatpush2.bf16.msra.mxu0 0
    %145 = vmatprep.subr.bf16.mxu0 0
    %146 = vmatpush2.bf16.msra.mxu0 0
    %147 = vmatprep.mubr.bf16.mxu0 0
    %148 = vmatmul.mubr.bf16.gmra.mxu0 %v48
    %v149 = vpop.f32.mrf.mxu0
    %v150 = vadd.f32 0.0, %v149
    %v151 = vpop.f32.mrf.mxu0
    %v152 = vadd.f32 0.0, %v151
    %v153 = vpop.f32.mrf.mxu0
    %v154 = vpop.f32.mrf.mxu0
    %155 = vdwg.mxu0
    %156 = vst [vmem:[#allocation2] sm:$0xff] %v150
    %s157 = scalar_lea.vmem [#allocation2], 8
    %158 = vst [vmem:[%s157] sm:$0xff] %v152
    %v159 = vpack.c.bf16 %v90, %v90
    %v160 = vld [vmem:[%s3] sm:$0xf]
    %v161 = vld [vmem:[%s3 + $0x4] sm:$0xf]
    %v162 = vld [vmem:[%s3 + $0x8] sm:$0xf]
    %v163 = vld [vmem:[%s3 + $0xc] sm:$0xf]
    %v164 = vld [vmem:[%s3 + $0x10] sm:$0xf]
    %v165 = vld [vmem:[%s3 + $0x14] sm:$0xf]
    %v166 = vld [vmem:[%s3 + $0x18] sm:$0xf]
    %v167 = vld [vmem:[%s3 + $0x1c] sm:$0xf]
    %v168 = vld [vmem:[%s3 + $0x20] sm:$0xf]
    %v169 = vld [vmem:[%s3 + $0x24] sm:$0xf]
    %v170 = vld [vmem:[%s3 + $0x28] sm:$0xf]
    %v171 = vld [vmem:[%s3 + $0x2c] sm:$0xf]
    %v172 = vld [vmem:[%s3 + $0x30] sm:$0xf]
    %v173 = vld [vmem:[%s3 + $0x34] sm:$0xf]
    %v174 = vld [vmem:[%s3 + $0x38] sm:$0xf]
    %v175 = vld [vmem:[%s3 + $0x3c] sm:$0xf]
    %v176 = vld [vmem:[#allocation2] sm:$0xff]
    %v193 = vunpack.c.l.b16 %v160
    %v194 = vunpack.c.l.b16 %v161
    %v195 = vunpack.c.l.b16 %v162
    %v196 = vunpack.c.l.b16 %v163
    %v197 = vunpack.c.l.b16 %v164
    %v198 = vunpack.c.l.b16 %v165
    %v199 = vunpack.c.l.b16 %v166
    %v200 = vunpack.c.l.b16 %v167
    %v201 = vunpack.c.l.b16 %v168
    %v202 = vunpack.c.l.b16 %v169
    %v203 = vunpack.c.l.b16 %v170
    %v204 = vunpack.c.l.b16 %v171
    %v205 = vunpack.c.l.b16 %v172
    %v206 = vunpack.c.l.b16 %v173
    %v207 = vunpack.c.l.b16 %v174
    %v208 = vunpack.c.l.b16 %v175
    %v209 = vpack.c.b16 %v194, %v193
    %v210 = vpack.c.b16 %v196, %v195
    %v211 = vpack.c.b16 %v198, %v197
    %v212 = vpack.c.b16 %v200, %v199
    %v213 = vpack.c.b16 %v202, %v201
    %v214 = vpack.c.b16 %v204, %v203
    %v215 = vpack.c.b16 %v206, %v205
    %v216 = vpack.c.b16 %v208, %v207
    %225 = vmatprep.subr.bf16.mxu0 0
    %226 = vmatpush1.bf16.msra.mxu0 %v216
    %227 = vmatprep.subr.bf16.mxu0 0
    %228 = vmatpush1.bf16.msra.mxu0 %v215
    %229 = vmatprep.subr.bf16.mxu0 0
    %230 = vmatpush1.bf16.msra.mxu0 %v214
    %231 = vmatprep.subr.bf16.mxu0 0
    %232 = vmatpush1.bf16.msra.mxu0 %v213
    %233 = vmatprep.subr.bf16.mxu0 0
    %234 = vmatpush1.bf16.msra.mxu0 %v212
    %235 = vmatprep.subr.bf16.mxu0 0
    %236 = vmatpush1.bf16.msra.mxu0 %v211
    %237 = vmatprep.subr.bf16.mxu0 0
    %238 = vmatpush1.bf16.msra.mxu0 %v210
    %239 = vmatprep.subr.bf16.mxu0 0
    %240 = vmatpush1.bf16.msra.mxu0 %v209
    %241 = vmatprep.subr.bf16.mxu0 0
    %242 = vmatpush2.bf16.msra.mxu0 0
    %243 = vmatprep.subr.bf16.mxu0 0
    %244 = vmatpush2.bf16.msra.mxu0 0
    %245 = vmatprep.subr.bf16.mxu0 0
    %246 = vmatpush2.bf16.msra.mxu0 0
    %247 = vmatprep.subr.bf16.mxu0 0
    %248 = vmatpush2.bf16.msra.mxu0 0
    %249 = vmatprep.subr.bf16.mxu0 0
    %250 = vmatpush2.bf16.msra.mxu0 0
    %251 = vmatprep.subr.bf16.mxu0 0
    %252 = vmatpush2.bf16.msra.mxu0 0
    %253 = vmatprep.subr.bf16.mxu0 0
    %254 = vmatpush2.bf16.msra.mxu0 0
    %255 = vmatprep.subr.bf16.mxu0 0
    %256 = vmatpush2.bf16.msra.mxu0 0
    %257 = vmatprep.mubr.bf16.mxu0 0
    %258 = vmatmul.mubr.bf16.gmra.mxu0 %v159
    %v259 = vpop.f32.mrf.mxu0
    %v260 = vadd.f32 %v176, %v259
    %v261 = vpop.f32.mrf.mxu0
    %v262 = vpop.f32.mrf.mxu0
    %v263 = vpop.f32.mrf.mxu0
    %264 = vdwg.mxu0
    %s265 = scalar_lea.vmem %s4, 1
    %v266 = vld [vmem:[%s265] sm:$0x1]
    %v268 = vlaneseq
    %v269 = vshrl.u32 %v268, 7
    %v270 = vsub.s32 0, %v269
    %v271 = vrot.slane %v266, %v270
    %v273 = vadd.f32 %v260, %v271
    %v274 = vmax.f32 %v273, 0.0
    %v275 = vpack.c.bf16 %v274, %v274
    %s276 = scalar_lea.vmem %s3, 64
    %v277 = vld [vmem:[%s276] sm:$0xf]
    %v278 = vld [vmem:[%s276 + $0x4] sm:$0xf]
    %v279 = vld [vmem:[%s276 + $0x8] sm:$0xf]
    %v280 = vld [vmem:[%s276 + $0xc] sm:$0xf]
    %v281 = vld [vmem:[%s276 + $0x10] sm:$0xf]
    %v282 = vld [vmem:[%s276 + $0x14] sm:$0xf]
    %v283 = vld [vmem:[%s276 + $0x18] sm:$0xf]
    %v284 = vld [vmem:[%s276 + $0x1c] sm:$0xf]
    %v285 = vld [vmem:[%s276 + $0x20] sm:$0xf]
    %v286 = vld [vmem:[%s276 + $0x24] sm:$0xf]
    %v287 = vld [vmem:[%s276 + $0x28] sm:$0xf]
    %v288 = vld [vmem:[%s276 + $0x2c] sm:$0xf]
    %v289 = vld [vmem:[%s276 + $0x30] sm:$0xf]
    %v290 = vld [vmem:[%s276 + $0x34] sm:$0xf]
    %v291 = vld [vmem:[%s276 + $0x38] sm:$0xf]
    %v292 = vld [vmem:[%s276 + $0x3c] sm:$0xf]
    %v293 = vld [vmem:[%s157] sm:$0xff]
    %v310 = vunpack.c.l.b16 %v277
    %v311 = vunpack.c.l.b16 %v278
    %v312 = vunpack.c.l.b16 %v279
    %v313 = vunpack.c.l.b16 %v280
    %v314 = vunpack.c.l.b16 %v281
    %v315 = vunpack.c.l.b16 %v282
    %v316 = vunpack.c.l.b16 %v283
    %v317 = vunpack.c.l.b16 %v284
    %v318 = vunpack.c.l.b16 %v285
    %v319 = vunpack.c.l.b16 %v286
    %v320 = vunpack.c.l.b16 %v287
    %v321 = vunpack.c.l.b16 %v288
    %v322 = vunpack.c.l.b16 %v289
    %v323 = vunpack.c.l.b16 %v290
    %v324 = vunpack.c.l.b16 %v291
    %v325 = vunpack.c.l.b16 %v292
    %v326 = vpack.c.b16 %v311, %v310
    %v327 = vpack.c.b16 %v313, %v312
    %v328 = vpack.c.b16 %v315, %v314
    %v329 = vpack.c.b16 %v317, %v316
    %v330 = vpack.c.b16 %v319, %v318
    %v331 = vpack.c.b16 %v321, %v320
    %v332 = vpack.c.b16 %v323, %v322
    %v333 = vpack.c.b16 %v325, %v324
    %342 = vmatprep.subr.bf16.mxu0 0
    %343 = vmatpush1.bf16.msra.mxu0 %v333
    %344 = vmatprep.subr.bf16.mxu0 0
    %345 = vmatpush1.bf16.msra.mxu0 %v332
    %346 = vmatprep.subr.bf16.mxu0 0
    %347 = vmatpush1.bf16.msra.mxu0 %v331
    %348 = vmatprep.subr.bf16.mxu0 0
    %349 = vmatpush1.bf16.msra.mxu0 %v330
    %350 = vmatprep.subr.bf16.mxu0 0
    %351 = vmatpush1.bf16.msra.mxu0 %v329
    %352 = vmatprep.subr.bf16.mxu0 0
    %353 = vmatpush1.bf16.msra.mxu0 %v328
    %354 = vmatprep.subr.bf16.mxu0 0
    %355 = vmatpush1.bf16.msra.mxu0 %v327
    %356 = vmatprep.subr.bf16.mxu0 0
    %357 = vmatpush1.bf16.msra.mxu0 %v326
    %358 = vmatprep.subr.bf16.mxu0 0
    %359 = vmatpush2.bf16.msra.mxu0 0
    %360 = vmatprep.subr.bf16.mxu0 0
    %361 = vmatpush2.bf16.msra.mxu0 0
    %362 = vmatprep.subr.bf16.mxu0 0
    %363 = vmatpush2.bf16.msra.mxu0 0
    %364 = vmatprep.subr.bf16.mxu0 0
    %365 = vmatpush2.bf16.msra.mxu0 0
    %366 = vmatprep.subr.bf16.mxu0 0
    %367 = vmatpush2.bf16.msra.mxu0 0
    %368 = vmatprep.subr.bf16.mxu0 0
    %369 = vmatpush2.bf16.msra.mxu0 0
    %370 = vmatprep.subr.bf16.mxu0 0
    %371 = vmatpush2.bf16.msra.mxu0 0
    %372 = vmatprep.subr.bf16.mxu0 0
    %373 = vmatpush2.bf16.msra.mxu0 0
    %374 = vmatprep.mubr.bf16.mxu0 0
    %375 = vmatmul.mubr.bf16.gmra.mxu0 %v275
    %v376 = vpop.f32.mrf.mxu0
    %v377 = vadd.f32 %v293, %v376
    %v378 = vpop.f32.mrf.mxu0
    %v379 = vpop.f32.mrf.mxu0
    %v380 = vpop.f32.mrf.mxu0
    %381 = vdwg.mxu0
    %s382 = scalar_lea.vmem %s4, 2
    %v383 = vld [vmem:[%s382] sm:$0x1]
    %v385 = vlaneseq
    %v386 = vshrl.u32 %v385, 7
    %v387 = vsub.s32 0, %v386
    %v388 = vrot.slane %v383, %v387
    %v390 = vadd.f32 %v377, %v388
    %v391 = vmax.f32 %v390, 0.0
    %392 = vst [vmem:[#allocation3] sm:$0xff] %v391
    // Predicated region
    $region22: #{skip_network.1} parent=1 // pred_check
      _
    $region23: #{skip_network.1} parent=1 // pred_check_branch
      %394 = sbr.rel (0) target = $region25
    $region24: #{skip_network.1} parent=1 // pred_region
      %s396 = ssub.s32 128, 128
      %397 = vsyncadd [#allocation4], %s396
      %s399 = sshll.u32 [#allocation3], 4
      %s400 = int_to_ptr.vmem [resolvable:$true] %s399
      %402 = dma.vmem_to_hbm [thread:$0]  %s400, 128, %s5, [#allocation4]
    $region25: #{skip_network.1} parent=1 // pred_fallthru
      _
    // Predicated region
    $region26: #{skip_network.1} parent=1 // pred_check
      _
    $region27: #{skip_network.1} parent=1 // pred_check_branch
      %404 = sbr.rel (0) target = $region29
    $region28: #{skip_network.1} parent=1 // pred_region
      %405 = dma.done [#allocation4], 128
    $region29: #{skip_network.1} parent=1 // pred_fallthru
      _
    %406 = vsyncpa [#allocation4], 1

</llo_original>
